<compile_context>
chip_gen: v7x
topology: tpu7x:2x2x1
jax: 0.10.0
libtpu: 0.0.40
codegen_flags: <defaults>
</compile_context>

<pallas_src>
import functools

import jax
import jax.numpy as jnp
from jax.experimental import pallas as pl
from jax.experimental.pallas import tpu as pltpu

LN_EPS = 1e-5       # PyTorch nn.LayerNorm default eps
LANE = 128
SUBLANE = 8


def _round_up(x, m):
    return ((x + m - 1) // m) * m


def ffn_kernel(x_ref, w1_ref, b1_ref, gamma_ref, beta_ref, w2_ref, b2_ref, o_ref):
    # Linear 1: (tm, D_in) @ (D_in, H); operands in native dtype, f32 accumulation on the MXU.
    h = jnp.dot(x_ref[...], w1_ref[...], preferred_element_type=jnp.float32)
    h = h + b1_ref[...].astype(jnp.float32)

    # Dropout: identity at inference time.
    # TODO(synk): training-mode dropout (pltpu.prng_* masking) not implemented.

    # LayerNorm over the hidden dim, in f32. One-pass stats: both reductions go to the XLU
    # back-to-back (no serial mean -> centered -> var dependency between the two matmuls).
    hdim = h.shape[-1]
    inv_h = jnp.float32(1.0 / hdim)
    s1 = jnp.sum(h, axis=-1, keepdims=True)
    s2 = jnp.sum(h * h, axis=-1, keepdims=True)
    mean = s1 * inv_h
    var = jnp.maximum(s2 * inv_h - mean * mean, 0.0)   # clamp tiny negative fp error
    inv_std = jax.lax.rsqrt(var + LN_EPS)              # EUP
    h_norm = (h - mean) * inv_std
    h_norm = (h_norm * gamma_ref[...].astype(jnp.float32)
              + beta_ref[...].astype(jnp.float32))

    # ReLU, then cast to the weight dtype so Linear 2 uses the fast MXU path for bf16 weights.
    h_act = jnp.maximum(h_norm, 0.0).astype(w2_ref.dtype)

    # Linear 2: (tm, H) @ (H, D_out_p) with f32 accumulation.
    out = jnp.dot(h_act, w2_ref[...], preferred_element_type=jnp.float32)
    out = out + b2_ref[...].astype(jnp.float32)

    o_ref[...] = out.astype(o_ref.dtype)


def prepare_ffn_params(w1, b1, gamma, beta, w2, b2):
    """One-time (out of the hot path) parameter prep: lane-dense output pad + bias reshapes.

    Returns (params_tuple, d_out). Feed params_tuple to position_wise_ffn(..., d_out=d_out).
    """
    H = w1.shape[1]
    D_out = w2.shape[1]
    D_out_p = _round_up(D_out, LANE)
    if D_out_p != D_out:
        # Zero-padded columns -> padded output columns are exactly 0 and sliced off later.
        w2 = jnp.pad(w2, ((0, 0), (0, D_out_p - D_out)))
        b2 = jnp.pad(b2, (0, D_out_p - D_out))
    params = (
        w1,
        b1.reshape(1, H),
        gamma.reshape(1, H),
        beta.reshape(1, H),
        w2,
        b2.reshape(1, D_out_p),
    )
    return params, D_out


@functools.partial(jax.jit, static_argnames=("d_out", "tm", "x_buffers"))
def position_wise_ffn(x, w1, b1_2d, gamma_2d, beta_2d, w2_p, b2_2d, *,
                      d_out, tm=256, x_buffers=2):
    """x: (batch, seq, input_dim) -> (batch, seq, d_out). Params from prepare_ffn_params."""
    B, S, D_in = x.shape
    H = w1.shape[1]
    D_out_p = w2_p.shape[1]
    M = B * S

    x2d = x.reshape(M, D_in)   # no padded copy of the activations

    # Balanced row tiles; force >=2 grid steps (v7x megacore) whenever there is enough work.
    n_tiles = pl.cdiv(M, tm)
    if n_tiles < 2 and M > SUBLANE:
        n_tiles = 2
    tm_eff = _round_up(pl.cdiv(M, n_tiles), SUBLANE)
    grid = (pl.cdiv(M, tm_eff),)

    itemsize = jnp.dtype(x.dtype).itemsize
    cost = pl.CostEstimate(
        flops=2 * M * (D_in * H + H * D_out_p) + 10 * M * H,
        transcendentals=M,
        bytes_accessed=(M * D_in + D_in * H + H * D_out_p + M * D_out_p) * itemsize,
    )

    # Constant-index blocks: nothing to pipeline, single-buffer them (halves their VMEM).
    const_buf = pl.Buffered(1)

    out2d = pl.pallas_call(
        ffn_kernel,
        out_shape=jax.ShapeDtypeStruct((M, D_out_p), x.dtype),
        grid_spec=pltpu.PrefetchScalarGridSpec(
            num_scalar_prefetch=0,
            grid=grid,
            in_specs=[
                pl.BlockSpec((tm_eff, D_in), lambda i: (i, 0),
                             pipeline_mode=pl.Buffered(x_buffers)),       # x rows (streamed)
                pl.BlockSpec((D_in, H), lambda i: (0, 0),
                             pipeline_mode=const_buf),                    # W1 (resident)
                pl.BlockSpec((1, H), lambda i: (0, 0),
                             pipeline_mode=const_buf),                    # b1
                pl.BlockSpec((1, H), lambda i: (0, 0),
                             pipeline_mode=const_buf),                    # LN gamma
                pl.BlockSpec((1, H), lambda i: (0, 0),
                             pipeline_mode=const_buf),                    # LN beta
                pl.BlockSpec((H, D_out_p), lambda i: (0, 0),
                             pipeline_mode=const_buf),                    # W2 (resident)
                pl.BlockSpec((1, D_out_p), lambda i: (0, 0),
                             pipeline_mode=const_buf),                    # b2
            ],
            out_specs=pl.BlockSpec((tm_eff, D_out_p), lambda i: (i, 0)),  # lane-dense output
        ),
        compiler_params=pltpu.CompilerParams(
            dimension_semantics=("parallel",),
            # Above the default scoped limit but safely under v7x's 64 MiB physical VMEM.
            vmem_limit_bytes=48 * 1024 * 1024,
        ),
        cost_estimate=cost,
    )(x2d, w1, b1_2d, gamma_2d, beta_2d, w2_p, b2_2d)

    if d_out != D_out_p:
        out2d = out2d[:, :d_out]
    return out2d.reshape(B, S, d_out)


def reference_ffn(x, w1, b1, gamma, beta, w2, b2):
    """Pure-JAX reference matching the PyTorch eval-mode forward (f32)."""
    h = jnp.einsum("bsd,dh->bsh", x, w1) + b1
    mean = jnp.mean(h, axis=-1, keepdims=True)
    var = jnp.mean((h - mean) ** 2, axis=-1, keepdims=True)
    hn = (h - mean) / jnp.sqrt(var + LN_EPS)
    hn = hn * gamma + beta
    hr = jnp.maximum(hn, 0.0)
    return jnp.einsum("bsh,ho->bso", hr, w2) + b2


if __name__ == "__main__":
    # Small shapes consistent with the module: batch=2, seq=8, input_dim=32,
    # hidden_size=128, output_dim=32.
    B, S, D_in, H, D_out = 2, 8, 32, 128, 32

    key = jax.random.PRNGKey(0)
    kx, kw1, kb1, kw2, kb2 = jax.random.split(key, 5)

    x = jax.random.normal(kx, (B, S, D_in), dtype=jnp.float32)

    # Deterministic parameter init (mirrors init_weight's uniform(-0.1, 0.1) for weights).
    w1 = jax.random.uniform(kw1, (D_in, H), minval=-0.1, maxval=0.1, dtype=jnp.float32)
    b1 = jax.random.uniform(kb1, (H,), minval=-0.1, maxval=0.1, dtype=jnp.float32)
    gamma = jnp.ones((H,), dtype=jnp.float32)   # LayerNorm default weight
    beta = jnp.zeros((H,), dtype=jnp.float32)   # LayerNorm default bias
    w2 = jax.random.uniform(kw2, (H, D_out), minval=-0.1, maxval=0.1, dtype=jnp.float32)
    b2 = jax.random.uniform(kb2, (D_out,), minval=-0.1, maxval=0.1, dtype=jnp.float32)

    # One-time parameter prep (output-lane padding + bias reshapes) outside the hot path.
    params, d_out = prepare_ffn_params(w1, b1, gamma, beta, w2, b2)
    params = jax.block_until_ready(params)

    out = position_wise_ffn(x, *params, d_out=d_out)
    out = jax.block_until_ready(out)

    ref = reference_ffn(x, w1, b1, gamma, beta, w2, b2)
    assert out.shape == (B, S, D_out)
    assert jnp.allclose(out, ref, atol=1e-4, rtol=1e-4), "mismatch vs reference"

    print("KERNEL_OK")
</pallas_src>

<mosaic_0001>
module attributes {stable_mosaic.version = 11 : i64} {
  func.func @ffn_kernel(%arg0: i32, %arg1: memref<8x32xf32, #tpu.memory_space<vmem>>, %arg2: memref<32x128xf32, #tpu.memory_space<vmem>>, %arg3: memref<1x128xf32, #tpu.memory_space<vmem>>, %arg4: memref<1x128xf32, #tpu.memory_space<vmem>>, %arg5: memref<1x128xf32, #tpu.memory_space<vmem>>, %arg6: memref<128x128xf32, #tpu.memory_space<vmem>>, %arg7: memref<1x128xf32, #tpu.memory_space<vmem>>, %arg8: memref<8x128xf32, #tpu.memory_space<vmem>>) attributes {dimension_semantics = [#tpu.dimension_semantics<parallel>], iteration_bounds = array<i64: 2>, scalar_prefetch = 0 : i64, scratch_operands = 0 : i64, tpu.core_type = #tpu.core_type<tc>, window_params = [{pipeline_mode = #tpu.pipeline_mode<double_buffered>, transform_indices = @transform_0, window_bounds = array<i64: 8, 32>}, {pipeline_mode = #tpu.pipeline_mode<synchronous>, transform_indices = @transform_1, window_bounds = array<i64: 32, 128>}, {pipeline_mode = #tpu.pipeline_mode<synchronous>, transform_indices = @transform_2, window_bounds = array<i64: 1, 128>}, {pipeline_mode = #tpu.pipeline_mode<synchronous>, transform_indices = @transform_3, window_bounds = array<i64: 1, 128>}, {pipeline_mode = #tpu.pipeline_mode<synchronous>, transform_indices = @transform_4, window_bounds = array<i64: 1, 128>}, {pipeline_mode = #tpu.pipeline_mode<synchronous>, transform_indices = @transform_5, window_bounds = array<i64: 128, 128>}, {pipeline_mode = #tpu.pipeline_mode<synchronous>, transform_indices = @transform_6, window_bounds = array<i64: 1, 128>}, {transform_indices = @transform_7, window_bounds = array<i64: 8, 128>}]} {
    %c0 = arith.constant 0 : index
    %c0_0 = arith.constant 0 : index
    %0 = vector.load %arg1[%c0, %c0_0] : memref<8x32xf32, #tpu.memory_space<vmem>>, vector<8x32xf32>
    %c0_1 = arith.constant 0 : index
    %c0_2 = arith.constant 0 : index
    %1 = vector.load %arg2[%c0_1, %c0_2] : memref<32x128xf32, #tpu.memory_space<vmem>>, vector<32x128xf32>
    %cst = arith.constant dense<0.000000e+00> : vector<8x128xf32>
    %2 = tpu.matmul %0, %1, %cst {dimension_numbers = #tpu.dot_dimension_numbers<[1], [0], [0], [1], [0, 0, 1, 1], [], []>} : vector<8x32xf32>, vector<32x128xf32>, vector<8x128xf32> -> vector<8x128xf32>
    %c0_3 = arith.constant 0 : index
    %c0_4 = arith.constant 0 : index
    %3 = vector.load %arg3[%c0_3, %c0_4] : memref<1x128xf32, #tpu.memory_space<vmem>>, vector<1x128xf32>
    %4 = vector.broadcast %3 : vector<1x128xf32> to vector<8x128xf32>
    %5 = arith.addf %2, %4 : vector<8x128xf32>
    %cst_5 = arith.constant dense<0.000000e+00> : vector<8xf32>
    %6 = vector.multi_reduction <add>, %5, %cst_5 [1] : vector<8x128xf32> to vector<8xf32>
    %7 = vector.shape_cast %6 : vector<8xf32> to vector<8x1xf32>
    %8 = arith.mulf %5, %5 : vector<8x128xf32>
    %cst_6 = arith.constant dense<0.000000e+00> : vector<8xf32>
    %9 = vector.multi_reduction <add>, %8, %cst_6 [1] : vector<8x128xf32> to vector<8xf32>
    %10 = vector.shape_cast %9 : vector<8xf32> to vector<8x1xf32>
    %cst_7 = arith.constant 7.812500e-03 : f32
    %11 = vector.broadcast %cst_7 : f32 to vector<8x1xf32>
    %12 = arith.mulf %7, %11 : vector<8x1xf32>
    %cst_8 = arith.constant 7.812500e-03 : f32
    %13 = vector.broadcast %cst_8 : f32 to vector<8x1xf32>
    %14 = arith.mulf %10, %13 : vector<8x1xf32>
    %15 = arith.mulf %12, %12 : vector<8x1xf32>
    %16 = arith.subf %14, %15 : vector<8x1xf32>
    %cst_9 = arith.constant 0.000000e+00 : f32
    %17 = vector.broadcast %cst_9 : f32 to vector<8x1xf32>
    %18 = arith.maximumf %16, %17 : vector<8x1xf32>
    %cst_10 = arith.constant 9.99999974E-6 : f32
    %19 = vector.broadcast %cst_10 : f32 to vector<8x1xf32>
    %20 = arith.addf %18, %19 : vector<8x1xf32>
    %21 = math.rsqrt %20 : vector<8x1xf32>
    %22 = vector.broadcast %12 : vector<8x1xf32> to vector<8x128xf32>
    %23 = arith.subf %5, %22 : vector<8x128xf32>
    %24 = vector.broadcast %21 : vector<8x1xf32> to vector<8x128xf32>
    %25 = arith.mulf %23, %24 : vector<8x128xf32>
    %c0_11 = arith.constant 0 : index
    %c0_12 = arith.constant 0 : index
    %26 = vector.load %arg4[%c0_11, %c0_12] : memref<1x128xf32, #tpu.memory_space<vmem>>, vector<1x128xf32>
    %27 = vector.broadcast %26 : vector<1x128xf32> to vector<8x128xf32>
    %28 = arith.mulf %25, %27 : vector<8x128xf32>
    %c0_13 = arith.constant 0 : index
    %c0_14 = arith.constant 0 : index
    %29 = vector.load %arg5[%c0_13, %c0_14] : memref<1x128xf32, #tpu.memory_space<vmem>>, vector<1x128xf32>
    %30 = vector.broadcast %29 : vector<1x128xf32> to vector<8x128xf32>
    %31 = arith.addf %28, %30 : vector<8x128xf32>
    %cst_15 = arith.constant 0.000000e+00 : f32
    %32 = vector.broadcast %cst_15 : f32 to vector<8x128xf32>
    %33 = arith.maximumf %31, %32 : vector<8x128xf32>
    %c0_16 = arith.constant 0 : index
    %c0_17 = arith.constant 0 : index
    %34 = vector.load %arg6[%c0_16, %c0_17] : memref<128x128xf32, #tpu.memory_space<vmem>>, vector<128x128xf32>
    %cst_18 = arith.constant dense<0.000000e+00> : vector<8x128xf32>
    %35 = tpu.matmul %33, %34, %cst_18 {dimension_numbers = #tpu.dot_dimension_numbers<[1], [0], [0], [1], [0, 0, 1, 1], [], []>} : vector<8x128xf32>, vector<128x128xf32>, vector<8x128xf32> -> vector<8x128xf32>
    %c0_19 = arith.constant 0 : index
    %c0_20 = arith.constant 0 : index
    %36 = vector.load %arg7[%c0_19, %c0_20] : memref<1x128xf32, #tpu.memory_space<vmem>>, vector<1x128xf32>
    %37 = vector.broadcast %36 : vector<1x128xf32> to vector<8x128xf32>
    %38 = arith.addf %35, %37 : vector<8x128xf32>
    %c0_21 = arith.constant 0 : index
    %c0_22 = arith.constant 0 : index
    %39 = vector.load %arg8[%c0_21, %c0_22] : memref<8x128xf32, #tpu.memory_space<vmem>>, vector<8x128xf32>
    tpu.vector_store %arg8[%c0_21, %c0_22], %38 {strides = array<i32>} : memref<8x128xf32, #tpu.memory_space<vmem>>, vector<8x128xf32>,
    return
  }
  func.func @transform_0(%arg0: i32) -> (i32, i32) {
    %c0_i32 = arith.constant 0 : i32
    %c0_i32_0 = arith.constant 0 : i32
    return %arg0, %c0_i32 : i32, i32
  }
  func.func @transform_1(%arg0: i32) -> (i32, i32) {
    %c0_i32 = arith.constant 0 : i32
    %c0_i32_0 = arith.constant 0 : i32
    %c0_i32_1 = arith.constant 0 : i32
    return %c0_i32, %c0_i32_0 : i32, i32
  }
  func.func @transform_2(%arg0: i32) -> (i32, i32) {
    %c0_i32 = arith.constant 0 : i32
    %c0_i32_0 = arith.constant 0 : i32
    %c0_i32_1 = arith.constant 0 : i32
    return %c0_i32, %c0_i32_0 : i32, i32
  }
  func.func @transform_3(%arg0: i32) -> (i32, i32) {
    %c0_i32 = arith.constant 0 : i32
    %c0_i32_0 = arith.constant 0 : i32
    %c0_i32_1 = arith.constant 0 : i32
    return %c0_i32, %c0_i32_0 : i32, i32
  }
  func.func @transform_4(%arg0: i32) -> (i32, i32) {
    %c0_i32 = arith.constant 0 : i32
    %c0_i32_0 = arith.constant 0 : i32
    %c0_i32_1 = arith.constant 0 : i32
    return %c0_i32, %c0_i32_0 : i32, i32
  }
  func.func @transform_5(%arg0: i32) -> (i32, i32) {
    %c0_i32 = arith.constant 0 : i32
    %c0_i32_0 = arith.constant 0 : i32
    %c0_i32_1 = arith.constant 0 : i32
    return %c0_i32, %c0_i32_0 : i32, i32
  }
  func.func @transform_6(%arg0: i32) -> (i32, i32) {
    %c0_i32 = arith.constant 0 : i32
    %c0_i32_0 = arith.constant 0 : i32
    %c0_i32_1 = arith.constant 0 : i32
    return %c0_i32, %c0_i32_0 : i32, i32
  }
  func.func @transform_7(%arg0: i32) -> (i32, i32) {
    %c0_i32 = arith.constant 0 : i32
    %c0_i32_0 = arith.constant 0 : i32
    return %arg0, %c0_i32 : i32, i32
  }
}

</mosaic_0001>

<llo_original>
// kernel: position_wise_ffn.1
$region0: #{position_wise_ffn.1}
  #allocation0 [shape = 'u32[]', space=smem, size = 0x4, offset = 0x4, fixed_abs, tag = 'smem constant byte address 0x4 - core index']
  #allocation1 [shape = 'u32[144,128]{1,0:T(1,128)}', space=vmem, size = 0x12000, scoped, tag = 'internal scratch']
  %s0 = inlined_call_operand.hbm [shape: f32[16,32], index: 0, kind: input, shape index: {}]
  %s1 = inlined_call_operand.hbm [shape: f32[32,128], index: 1, kind: input, shape index: {}]
  %s2 = inlined_call_operand.vmem [shape: f32[1,128], index: 2, kind: input, shape index: {}]
  %s3 = inlined_call_operand.vmem [shape: f32[1,128], index: 3, kind: input, shape index: {}]
  %s4 = inlined_call_operand.vmem [shape: f32[1,128], index: 4, kind: input, shape index: {}]
  %s5 = inlined_call_operand.hbm [shape: f32[128,128], index: 5, kind: input, shape index: {}]
  %s6 = inlined_call_operand.vmem [shape: f32[1,128], index: 6, kind: input, shape index: {}]
  %s7 = inlined_call_operand.vmem [shape: f32[16,128], index: 7, kind: output, shape index: {}]
  %s8 = sld [smem:[#allocation0]]
  $region73: #{position_wise_ffn.1} parent=0
    _
  %s10 = ssub.s32 1, %s8
  %s11 = scalar_select 0, %s10, %s8
  $region1: #{position_wise_ffn.1} parent=0
    #allocation2 [shape = 'u8[8192]{0}', space=vmem, size = 0x2000, scoped, tag = 'input window, operand 0']
    #allocation3 [shape = 's32[2]{0}', space=sflag, size = 0x8, scoped, tag = 'scoped memory for position_wise_ffn.1']
    #allocation4 [shape = 'u8[16384]{0}', space=vmem, size = 0x4000, scoped, tag = 'input window, operand 1, single buffered']
    #allocation5 [shape = 's32[1]{0}', space=sflag, size = 0x4, scoped, tag = 'scoped memory for position_wise_ffn.1']
    #allocation6 [shape = 'u8[65536]{0}', space=vmem, size = 0x10000, scoped, tag = 'input window, operand 5, single buffered']
    %12 = vsyncpa [#allocation3], 0
    %s13 = scalar_lea.sflag [#allocation3], 1
    %14 = vsyncpa %s13, 0
    %15 = vsyncpa [#allocation5], 0
    loop: start=0, step=1, limit=4
    $region2: #{position_wise_ffn.1} parent=1 // loop_pre_header
      _
    $region3: #{position_wise_ffn.1} parent=1 // loop_header
      %s17 = sphi 0, %s21
      %p18 = scmp.ge.s32.totalorder %s17, 4
      %s27 = sphi 0, %s29
      %s30 = sphi 0, %s27
      %s31 = sphi 0, %s30
      %s47 = sphi 0, %s31
      %s51 = sphi 0, %s51
      %s53 = sphi 0, %s51
      %s54 = sphi 0, %s53
      %s68 = sphi 0, %s54
      %s72 = sphi 0, %s72
      %s74 = sphi 0, %s72
      %s75 = sphi 0, %s74
      %s89 = sphi 0, %s75
      %s93 = sphi 0, %s93
      %s95 = sphi 0, %s93
      %s96 = sphi 0, %s95
      %s110 = sphi 0, %s96
      %s114 = sphi 0, %s114
      %s116 = sphi 0, %s114
      %s117 = sphi 0, %s116
      %s131 = sphi 0, %s117
      %s135 = sphi 0, %s135
      %s137 = sphi 0, %s135
      %s138 = sphi 0, %s137
      %s152 = sphi 0, %s138
      %s156 = sphi 0, %s156
      %s158 = sphi 0, %s156
      %s159 = sphi 0, %s158
      %s173 = sphi 0, %s159
      %s179 = sphi 0, %s181
      %s182 = sphi 0, %s179
      %s183 = sphi 0, %s182
      %s199 = sphi 0, %s183
    $region4: #{position_wise_ffn.1} parent=1 // loop_header_branch
      %20 = sbr.rel (%p18) target = $region8
    $region5: #{position_wise_ffn.1} parent=1 // loop_body
      %s22 = ssub.s32 %s17, 1
      %s23 = ssub.s32 %s17, 2
      %s24 = sadd.s32 %s17, 1
      %s25 = ssub.s32 %s17, %s24
      %p26 = scmp.eq.s32.totalorder %s25, 0
      %s28 = sadd.s32 %s27, 1
      %s29 = scalar_select %p26, %s27, %s28
      %p32 = pneg %p26
      %p33 = scmp.eq.s32.totalorder %s17, 1
      %p34 = por %p32, %p33
      %p35 = scmp.ne.s32.totalorder %s27, %s30
      %p36 = scmp.eq.s32.totalorder %s17, 0
      %p37 = por %p35, %p36
      %p38 = scmp.ne.s32.totalorder %s27, %s30
      %p39 = scmp.eq.s32.totalorder %s22, 1
      %p40 = por %p38, %p39
      %p41 = scmp.ne.s32.totalorder %s30, %s31
      %p42 = scmp.eq.s32.totalorder %s22, 0
      %p43 = por %p41, %p42
      %p44 = scmp.ne.s32.totalorder %s30, %s31
      %p45 = scmp.eq.s32.totalorder %s23, 1
      %p46 = por %p44, %p45
      %p48 = scmp.ne.s32.totalorder %s31, %s47
      %p49 = scmp.eq.s32.totalorder %s23, 0
      %p50 = por %p48, %p49
      %s52 = sadd.s32 %s51, 1
      %p55 = scmp.eq.s32.totalorder %s17, 1
      %p56 = scmp.ne.s32.totalorder %s51, %s53
      %p57 = scmp.eq.s32.totalorder %s17, 0
      %p58 = por %p56, %p57
      %p59 = scmp.ne.s32.totalorder %s51, %s53
      %p60 = scmp.eq.s32.totalorder %s22, 1
      %p61 = por %p59, %p60
      %p62 = scmp.ne.s32.totalorder %s53, %s54
      %p63 = scmp.eq.s32.totalorder %s22, 0
      %p64 = por %p62, %p63
      %p65 = scmp.ne.s32.totalorder %s53, %s54
      %p66 = scmp.eq.s32.totalorder %s23, 1
      %p67 = por %p65, %p66
      %p69 = scmp.ne.s32.totalorder %s54, %s68
      %p70 = scmp.eq.s32.totalorder %s23, 0
      %p71 = por %p69, %p70
      %s73 = sadd.s32 %s72, 1
      %p76 = scmp.eq.s32.totalorder %s17, 1
      %p77 = scmp.ne.s32.totalorder %s72, %s74
      %p78 = scmp.eq.s32.totalorder %s17, 0
      %p79 = por %p77, %p78
      %p80 = scmp.ne.s32.totalorder %s72, %s74
      %p81 = scmp.eq.s32.totalorder %s22, 1
      %p82 = por %p80, %p81
      %p83 = scmp.ne.s32.totalorder %s74, %s75
      %p84 = scmp.eq.s32.totalorder %s22, 0
      %p85 = por %p83, %p84
      %p86 = scmp.ne.s32.totalorder %s74, %s75
      %p87 = scmp.eq.s32.totalorder %s23, 1
      %p88 = por %p86, %p87
      %p90 = scmp.ne.s32.totalorder %s75, %s89
      %p91 = scmp.eq.s32.totalorder %s23, 0
      %p92 = por %p90, %p91
      %s94 = sadd.s32 %s93, 1
      %p97 = scmp.eq.s32.totalorder %s17, 1
      %p98 = scmp.ne.s32.totalorder %s93, %s95
      %p99 = scmp.eq.s32.totalorder %s17, 0
      %p100 = por %p98, %p99
      %p101 = scmp.ne.s32.totalorder %s93, %s95
      %p102 = scmp.eq.s32.totalorder %s22, 1
      %p103 = por %p101, %p102
      %p104 = scmp.ne.s32.totalorder %s95, %s96
      %p105 = scmp.eq.s32.totalorder %s22, 0
      %p106 = por %p104, %p105
      %p107 = scmp.ne.s32.totalorder %s95, %s96
      %p108 = scmp.eq.s32.totalorder %s23, 1
      %p109 = por %p107, %p108
      %p111 = scmp.ne.s32.totalorder %s96, %s110
      %p112 = scmp.eq.s32.totalorder %s23, 0
      %p113 = por %p111, %p112
      %s115 = sadd.s32 %s114, 1
      %p118 = scmp.eq.s32.totalorder %s17, 1
      %p119 = scmp.ne.s32.totalorder %s114, %s116
      %p120 = scmp.eq.s32.totalorder %s17, 0
      %p121 = por %p119, %p120
      %p122 = scmp.ne.s32.totalorder %s114, %s116
      %p123 = scmp.eq.s32.totalorder %s22, 1
      %p124 = por %p122, %p123
      %p125 = scmp.ne.s32.totalorder %s116, %s117
      %p126 = scmp.eq.s32.totalorder %s22, 0
      %p127 = por %p125, %p126
      %p128 = scmp.ne.s32.totalorder %s116, %s117
      %p129 = scmp.eq.s32.totalorder %s23, 1
      %p130 = por %p128, %p129
      %p132 = scmp.ne.s32.totalorder %s117, %s131
      %p133 = scmp.eq.s32.totalorder %s23, 0
      %p134 = por %p132, %p133
      %s136 = sadd.s32 %s135, 1
      %p139 = scmp.eq.s32.totalorder %s17, 1
      %p140 = scmp.ne.s32.totalorder %s135, %s137
      %p141 = scmp.eq.s32.totalorder %s17, 0
      %p142 = por %p140, %p141
      %p143 = scmp.ne.s32.totalorder %s135, %s137
      %p144 = scmp.eq.s32.totalorder %s22, 1
      %p145 = por %p143, %p144
      %p146 = scmp.ne.s32.totalorder %s137, %s138
      %p147 = scmp.eq.s32.totalorder %s22, 0
      %p148 = por %p146, %p147
      %p149 = scmp.ne.s32.totalorder %s137, %s138
      %p150 = scmp.eq.s32.totalorder %s23, 1
      %p151 = por %p149, %p150
      %p153 = scmp.ne.s32.totalorder %s138, %s152
      %p154 = scmp.eq.s32.totalorder %s23, 0
      %p155 = por %p153, %p154
      %s157 = sadd.s32 %s156, 1
      %p160 = scmp.eq.s32.totalorder %s17, 1
      %p161 = scmp.ne.s32.totalorder %s156, %s158
      %p162 = scmp.eq.s32.totalorder %s17, 0
      %p163 = por %p161, %p162
      %p164 = scmp.ne.s32.totalorder %s156, %s158
      %p165 = scmp.eq.s32.totalorder %s22, 1
      %p166 = por %p164, %p165
      %p167 = scmp.ne.s32.totalorder %s158, %s159
      %p168 = scmp.eq.s32.totalorder %s22, 0
      %p169 = por %p167, %p168
      %p170 = scmp.ne.s32.totalorder %s158, %s159
      %p171 = scmp.eq.s32.totalorder %s23, 1
      %p172 = por %p170, %p171
      %p174 = scmp.ne.s32.totalorder %s159, %s173
      %p175 = scmp.eq.s32.totalorder %s23, 0
      %p176 = por %p174, %p175
      %s177 = ssub.s32 %s17, %s24
      %p178 = scmp.eq.s32.totalorder %s177, 0
      %s180 = sadd.s32 %s179, 1
      %s181 = scalar_select %p178, %s179, %s180
      %p184 = pneg %p178
      %p185 = scmp.eq.s32.totalorder %s17, 1
      %p186 = por %p184, %p185
      %p187 = scmp.ne.s32.totalorder %s179, %s182
      %p188 = scmp.eq.s32.totalorder %s17, 0
      %p189 = por %p187, %p188
      %p190 = scmp.ne.s32.totalorder %s179, %s182
      %p191 = scmp.eq.s32.totalorder %s22, 1
      %p192 = por %p190, %p191
      %p193 = scmp.ne.s32.totalorder %s182, %s183
      %p194 = scmp.eq.s32.totalorder %s22, 0
      %p195 = por %p193, %p194
      %p196 = scmp.ne.s32.totalorder %s182, %s183
      %p197 = scmp.eq.s32.totalorder %s23, 1
      %p198 = por %p196, %p197
      %p200 = scmp.ne.s32.totalorder %s183, %s199
      %p201 = scmp.eq.s32.totalorder %s23, 0
      %p202 = por %p200, %p201
      %p203 = scmp.le.s32.totalorder 1, %s17
      %p204 = scmp.lt.s32.totalorder %s17, 3
      %p205 = pnand %p203, %p204
      %p206 = pneg %p205
      // Predicated region
      $region9: #{position_wise_ffn.1} parent=5 // pred_check
        _
      $region10: #{position_wise_ffn.1} parent=5 // pred_check_branch
        %208 = sbr.rel (%p205) target = $region12
      $region11: #{position_wise_ffn.1} parent=5 // pred_region
        %s209 = ssub.s32 %s17, 1
        // Predicated region
        $region13: #{position_wise_ffn.1} parent=11 // pred_check
          %p210 = pneg %p64
        $region14: #{position_wise_ffn.1} parent=11 // pred_check_branch
          %212 = sbr.rel (%p210) target = $region16
        $region15: #{position_wise_ffn.1} parent=11 // pred_region
          %s214 = ssub.s32 512, 512
          %215 = vsyncadd [#allocation5], %s214
          %s216 = sshll.u32 [#allocation4], 4
          %s217 = int_to_ptr.vmem [resolvable:$true] %s216
          %222 = dma.hbm_to_vmem [thread:$0]  %s1, 512, %s217, [#allocation5], 128, 128, 8
        $region16: #{position_wise_ffn.1} parent=11 // pred_fallthru
          _
        // Predicated region
        $region17: #{position_wise_ffn.1} parent=11 // pred_check
          %p223 = pneg %p85
        $region18: #{position_wise_ffn.1} parent=11 // pred_check_branch
          %225 = sbr.rel (%p223) target = $region20
        $region19: #{position_wise_ffn.1} parent=11 // pred_region
          _
        $region20: #{position_wise_ffn.1} parent=11 // pred_fallthru
          _
        // Predicated region
        $region21: #{position_wise_ffn.1} parent=11 // pred_check
          %p226 = pneg %p106
        $region22: #{position_wise_ffn.1} parent=11 // pred_check_branch
          %228 = sbr.rel (%p226) target = $region24
        $region23: #{position_wise_ffn.1} parent=11 // pred_region
          _
        $region24: #{position_wise_ffn.1} parent=11 // pred_fallthru
          _
        // Predicated region
        $region25: #{position_wise_ffn.1} parent=11 // pred_check
          %p229 = pneg %p127
        $region26: #{position_wise_ffn.1} parent=11 // pred_check_branch
          %231 = sbr.rel (%p229) target = $region28
        $region27: #{position_wise_ffn.1} parent=11 // pred_region
          _
        $region28: #{position_wise_ffn.1} parent=11 // pred_fallthru
          _
        // Predicated region
        $region29: #{position_wise_ffn.1} parent=11 // pred_check
          %p232 = pneg %p148
        $region30: #{position_wise_ffn.1} parent=11 // pred_check_branch
          %234 = sbr.rel (%p232) target = $region32
        $region31: #{position_wise_ffn.1} parent=11 // pred_region
          %s236 = ssub.s32 2048, 2048
          %237 = vsyncadd [#allocation5], %s236
          %s238 = sshll.u32 [#allocation6], 4
          %s239 = int_to_ptr.vmem [resolvable:$true] %s238
          %244 = dma.hbm_to_vmem [thread:$0]  %s5, 2048, %s239, [#allocation5], 128, 128, 8
        $region32: #{position_wise_ffn.1} parent=11 // pred_fallthru
          _
        // Predicated region
        $region33: #{position_wise_ffn.1} parent=11 // pred_check
          %p245 = pneg %p169
        $region34: #{position_wise_ffn.1} parent=11 // pred_check_branch
          %247 = sbr.rel (%p245) target = $region36
        $region35: #{position_wise_ffn.1} parent=11 // pred_region
          _
        $region36: #{position_wise_ffn.1} parent=11 // pred_fallthru
          _
      $region12: #{position_wise_ffn.1} parent=5 // pred_fallthru
        _
      %p248 = scmp.lt.s32.totalorder %s17, 2
      // Predicated region
      $region37: #{position_wise_ffn.1} parent=5 // pred_check
        %p249 = pneg %p248
      $region38: #{position_wise_ffn.1} parent=5 // pred_check_branch
        %251 = sbr.rel (%p249) target = $region40
      $region39: #{position_wise_ffn.1} parent=5 // pred_region
        // Predicated region
        $region41: #{position_wise_ffn.1} parent=39 // pred_check
          %p252 = pneg %p37
        $region42: #{position_wise_ffn.1} parent=39 // pred_check_branch
          %254 = sbr.rel (%p252) target = $region44
        $region43: #{position_wise_ffn.1} parent=39 // pred_region
          %s255 = sand.u32 %s27, 1
          %s256 = scalar_lea.sflag [#allocation3], %s255
          %s257 = sand.u32 %s27, 1
          %s258 = smul.addr %s257, 8
          %s259 = scalar_lea.vmem [#allocation2], %s258
          %s261 = ssub.s32 128, 128
          %262 = vsyncadd %s256, %s261
          %s263 = smul.addr %s17, 128
          %s264 = scalar_lea.hbm %s0, %s263
          %s266 = sshll.u32 %s259, 4
          %s267 = int_to_ptr.vmem [resolvable:$true] %s266
          %269 = dma.hbm_to_vmem [thread:$0]  %s264, 128, %s267, %s256
        $region44: #{position_wise_ffn.1} parent=39 // pred_fallthru
          _
      $region40: #{position_wise_ffn.1} parent=5 // pred_fallthru
        _
      %p270 = scmp.le.s32.totalorder 1, %s17
      %p271 = scmp.lt.s32.totalorder %s17, 3
      %p272 = pnand %p270, %p271
      %p273 = pneg %p272
      // Predicated region
      $region45: #{position_wise_ffn.1} parent=5 // pred_check
        _
      $region46: #{position_wise_ffn.1} parent=5 // pred_check_branch
        %275 = sbr.rel (%p272) target = $region48
      $region47: #{position_wise_ffn.1} parent=5 // pred_region
        %s276 = ssub.s32 %s17, 1
        %s277 = sand.u32 %s30, 1
        %s278 = scalar_lea.sflag [#allocation3], %s277
        %s279 = sand.u32 %s30, 1
        %s280 = smul.addr %s279, 8
        %s281 = scalar_lea.vmem [#allocation2], %s280
        // Predicated region
        $region49: #{position_wise_ffn.1} parent=47 // pred_check
          %p282 = pneg %p43
        $region50: #{position_wise_ffn.1} parent=47 // pred_check_branch
          %284 = sbr.rel (%p282) target = $region52
        $region51: #{position_wise_ffn.1} parent=47 // pred_region
          %285 = dma.done %s278, 128
        $region52: #{position_wise_ffn.1} parent=47 // pred_fallthru
          _
        // Predicated region
        $region53: #{position_wise_ffn.1} parent=47 // pred_check
          %p286 = pneg %p64
        $region54: #{position_wise_ffn.1} parent=47 // pred_check_branch
          %288 = sbr.rel (%p286) target = $region56
        $region55: #{position_wise_ffn.1} parent=47 // pred_region
          %289 = dma.done [#allocation5], 512
        $region56: #{position_wise_ffn.1} parent=47 // pred_fallthru
          _
        // Predicated region
        $region57: #{position_wise_ffn.1} parent=47 // pred_check
          %p290 = pneg %p148
        $region58: #{position_wise_ffn.1} parent=47 // pred_check_branch
          %292 = sbr.rel (%p290) target = $region60
        $region59: #{position_wise_ffn.1} parent=47 // pred_region
          %293 = dma.done [#allocation5], 2048
        $region60: #{position_wise_ffn.1} parent=47 // pred_fallthru
          _
        %s294 = sand.u32 %s30, 1
        %s295 = scalar_lea.sflag [#allocation3], %s294
        %s296 = sand.u32 %s30, 1
        %s297 = smul.addr %s296, 8
        %s298 = scalar_lea.vmem [#allocation2], %s297
        %p299 = pneg %p43
        %p300 = pneg %p40
        %p301 = pneg %p64
        %p302 = pneg %p61
        %p303 = pneg %p85
        %p304 = pneg %p82
        %p305 = pneg %p106
        %p306 = pneg %p103
        %p307 = pneg %p127
        %p308 = pneg %p124
        %p309 = pneg %p148
        %p310 = pneg %p145
        %p311 = pneg %p169
        %p312 = pneg %p166
        %p313 = pneg %p195
        %p314 = pneg %p192
        %p315 = scmp.lt.s32.totalorder %s22, 1
        %s316 = scalar_select %p315, %s22, 1
        %s317 = smul.addr %s316, 8
        %s318 = scalar_lea.vmem %s7, %s317
        %p319 = scmp.lt.s32.totalorder %s22, 1
        %s320 = scalar_select %p319, %s22, 1
        %s321 = smul.addr %s320, 8
        %s322 = scalar_lea.vmem %s7, %s321
        %v323 = vld [vmem:[%s281] sm:$0xff]
        %v324 = vld [vmem:[#allocation4] sm:$0xff]
        %v325 = vld [vmem:[#allocation4 + $0x8] sm:$0xff]
        %v326 = vld [vmem:[#allocation4 + $0x10] sm:$0xff]
        %v327 = vld [vmem:[#allocation4 + $0x18] sm:$0xff]
        %v328 = vld [vmem:[%s2] sm:$0x1]
        %v330 = vlaneseq
        %v331 = vshrl.u32 %v330, 7
        %v332 = vsub.s32 0, %v331
        %v333 = vrot.slane %v328, %v332
        %vm335 = vcmask 261120
        %v337 = vsel %vm335, %v323, 0
        %339 = vmatprep.subr.mxu0 0.0
        %340 = vmatpush1.msra.mxu0 %v324
        %341 = vmatprep.subr.mxu0 0.0
        %342 = vmatpush1.msra.mxu0 %v325
        %343 = vmatprep.subr.mxu0 0.0
        %344 = vmatpush1.msra.mxu0 %v326
        %345 = vmatprep.subr.mxu0 0.0
        %346 = vmatpush1.msra.mxu0 %v327
        %347 = vmatprep.subr.mxu0 0.0
        %348 = vmatpush1.msra.mxu0 0.0
        %349 = vmatprep.subr.mxu0 0.0
        %350 = vmatpush1.msra.mxu0 0.0
        %351 = vmatprep.subr.mxu0 0.0
        %352 = vmatpush1.msra.mxu0 0.0
        %353 = vmatprep.subr.mxu0 0.0
        %354 = vmatpush1.msra.mxu0 0.0
        %355 = vmatprep.subr.mxu0 0.0
        %356 = vmatpush1.msra.mxu0 0.0
        %357 = vmatprep.subr.mxu0 0.0
        %358 = vmatpush1.msra.mxu0 0.0
        %359 = vmatprep.subr.mxu0 0.0
        %360 = vmatpush1.msra.mxu0 0.0
        %361 = vmatprep.subr.mxu0 0.0
        %362 = vmatpush1.msra.mxu0 0.0
        %363 = vmatprep.subr.mxu0 0.0
        %364 = vmatpush1.msra.mxu0 0.0
        %365 = vmatprep.subr.mxu0 0.0
        %366 = vmatpush1.msra.mxu0 0.0
        %367 = vmatprep.subr.mxu0 0.0
        %368 = vmatpush1.msra.mxu0 0.0
        %369 = vmatprep.subr.mxu0 0.0
        %370 = vmatpush1.msra.mxu0 0.0
        %371 = vmatprep.subr.mxu0 0.0
        %372 = vmatpush1.msra.mxu0 0.0
        %373 = vmatprep.subr.mxu0 0.0
        %374 = vmatpush1.msra.mxu0 0.0
        %375 = vmatprep.subr.mxu0 0.0
        %376 = vmatpush1.msra.mxu0 0.0
        %377 = vmatprep.subr.mxu0 0.0
        %378 = vmatpush1.msra.mxu0 0.0
        %379 = vmatprep.subr.mxu0 0.0
        %380 = vmatpush1.msra.mxu0 0.0
        %381 = vmatprep.subr.mxu0 0.0
        %382 = vmatpush1.msra.mxu0 0.0
        %383 = vmatprep.subr.mxu0 0.0
        %384 = vmatpush1.msra.mxu0 0.0
        %385 = vmatprep.subr.mxu0 0.0
        %386 = vmatpush1.msra.mxu0 0.0
        %387 = vmatprep.subr.mxu0 0.0
        %388 = vmatpush1.msra.mxu0 0.0
        %389 = vmatprep.subr.mxu0 0.0
        %390 = vmatpush1.msra.mxu0 0.0
        %391 = vmatprep.subr.mxu0 0.0
        %392 = vmatpush1.msra.mxu0 0.0
        %393 = vmatprep.subr.mxu0 0.0
        %394 = vmatpush1.msra.mxu0 0.0
        %395 = vmatprep.subr.mxu0 0.0
        %396 = vmatpush1.msra.mxu0 0.0
        %397 = vmatprep.subr.mxu0 0.0
        %398 = vmatpush1.msra.mxu0 0.0
        %399 = vmatprep.subr.mxu0 0.0
        %400 = vmatpush1.msra.mxu0 0.0
        %401 = vmatprep.subr.mxu0 0.0
        %402 = vmatpush1.msra.mxu0 0.0
        %403 = vmatprep.mubr.f32.mxu0 0.0
        %404 = vmatmul.mubr.f32.gmra.mrb[0].mxu0 %v337
        %v405 = vpop.f32.mrb[0].mxu0
        %v406 = vadd.f32 %v333, %v405
        %v407 = vpop.f32.mrb[0].mxu0
        %408 = vdwg.mxu0
        %409 = vadd.xlane.f32.xlu0 %v406
        %v410 = vpop.xlane.xlu0 %409
        %v411 = vmul.f32 %v406, %v406
        %412 = vadd.xlane.f32.xlu0 %v411
        %v413 = vpop.xlane.xlu0 %412
        %v414 = vmul.f32 %v410, 0.0078125
        %v415 = vmul.f32 %v413, 0.0078125
        %v416 = vmul.f32 %v414, %v414
        %v417 = vsub.f32 %v415, %v416
        %v418 = vmax.f32 %v417, 0.0
        %v419 = vadd.f32 %v418, 1e-05
        %v420 = vrsqrt.pop %v419
        %v421 = vsub.f32 %v406, %v414
        %v422 = vmul.f32 %v421, %v420
        %v423 = vld [vmem:[%s3] sm:$0x1]
        %v425 = vlaneseq
        %v426 = vshrl.u32 %v425, 7
        %v427 = vsub.s32 0, %v426
        %v428 = vrot.slane %v423, %v427
        %v430 = vmul.f32 %v422, %v428
        %v431 = vld [vmem:[%s4] sm:$0x1]
        %v433 = vlaneseq
        %v434 = vshrl.u32 %v433, 7
        %v435 = vsub.s32 0, %v434
        %v436 = vrot.slane %v431, %v435
        %v438 = vadd.f32 %v430, %v436
        %v439 = vmax.f32 %v438, 0.0
        %v440 = vld [vmem:[#allocation6] sm:$0xff]
        %v441 = vld [vmem:[#allocation6 + $0x8] sm:$0xff]
        %v442 = vld [vmem:[#allocation6 + $0x10] sm:$0xff]
        %v443 = vld [vmem:[#allocation6 + $0x18] sm:$0xff]
        %v444 = vld [vmem:[#allocation6 + $0x20] sm:$0xff]
        %v445 = vld [vmem:[#allocation6 + $0x28] sm:$0xff]
        %v446 = vld [vmem:[#allocation6 + $0x30] sm:$0xff]
        %v447 = vld [vmem:[#allocation6 + $0x38] sm:$0xff]
        %v448 = vld [vmem:[#allocation6 + $0x40] sm:$0xff]
        %v449 = vld [vmem:[#allocation6 + $0x48] sm:$0xff]
        %v450 = vld [vmem:[#allocation6 + $0x50] sm:$0xff]
        %v451 = vld [vmem:[#allocation6 + $0x58] sm:$0xff]
        %v452 = vld [vmem:[#allocation6 + $0x60] sm:$0xff]
        %v453 = vld [vmem:[#allocation6 + $0x68] sm:$0xff]
        %v454 = vld [vmem:[#allocation6 + $0x70] sm:$0xff]
        %v455 = vld [vmem:[#allocation6 + $0x78] sm:$0xff]
        %v456 = vld [vmem:[%s6] sm:$0x1]
        %v458 = vlaneseq
        %v459 = vshrl.u32 %v458, 7
        %v460 = vsub.s32 0, %v459
        %v461 = vrot.slane %v456, %v460
        %463 = vmatprep.subr.mxu0 0.0
        %464 = vmatpush1.msra.mxu0 %v440
        %465 = vmatprep.subr.mxu0 0.0
        %466 = vmatpush1.msra.mxu0 %v441
        %467 = vmatprep.subr.mxu0 0.0
        %468 = vmatpush1.msra.mxu0 %v442
        %469 = vmatprep.subr.mxu0 0.0
        %470 = vmatpush1.msra.mxu0 %v443
        %471 = vmatprep.subr.mxu0 0.0
        %472 = vmatpush1.msra.mxu0 %v444
        %473 = vmatprep.subr.mxu0 0.0
        %474 = vmatpush1.msra.mxu0 %v445
        %475 = vmatprep.subr.mxu0 0.0
        %476 = vmatpush1.msra.mxu0 %v446
        %477 = vmatprep.subr.mxu0 0.0
        %478 = vmatpush1.msra.mxu0 %v447
        %479 = vmatprep.subr.mxu0 0.0
        %480 = vmatpush1.msra.mxu0 %v448
        %481 = vmatprep.subr.mxu0 0.0
        %482 = vmatpush1.msra.mxu0 %v449
        %483 = vmatprep.subr.mxu0 0.0
        %484 = vmatpush1.msra.mxu0 %v450
        %485 = vmatprep.subr.mxu0 0.0
        %486 = vmatpush1.msra.mxu0 %v451
        %487 = vmatprep.subr.mxu0 0.0
        %488 = vmatpush1.msra.mxu0 %v452
        %489 = vmatprep.subr.mxu0 0.0
        %490 = vmatpush1.msra.mxu0 %v453
        %491 = vmatprep.subr.mxu0 0.0
        %492 = vmatpush1.msra.mxu0 %v454
        %493 = vmatprep.subr.mxu0 0.0
        %494 = vmatpush1.msra.mxu0 %v455
        %495 = vmatprep.subr.mxu0 0.0
        %496 = vmatpush1.msra.mxu0 0.0
        %497 = vmatprep.subr.mxu0 0.0
        %498 = vmatpush1.msra.mxu0 0.0
        %499 = vmatprep.subr.mxu0 0.0
        %500 = vmatpush1.msra.mxu0 0.0
        %501 = vmatprep.subr.mxu0 0.0
        %502 = vmatpush1.msra.mxu0 0.0
        %503 = vmatprep.subr.mxu0 0.0
        %504 = vmatpush1.msra.mxu0 0.0
        %505 = vmatprep.subr.mxu0 0.0
        %506 = vmatpush1.msra.mxu0 0.0
        %507 = vmatprep.subr.mxu0 0.0
        %508 = vmatpush1.msra.mxu0 0.0
        %509 = vmatprep.subr.mxu0 0.0
        %510 = vmatpush1.msra.mxu0 0.0
        %511 = vmatprep.subr.mxu0 0.0
        %512 = vmatpush1.msra.mxu0 0.0
        %513 = vmatprep.subr.mxu0 0.0
        %514 = vmatpush1.msra.mxu0 0.0
        %515 = vmatprep.subr.mxu0 0.0
        %516 = vmatpush1.msra.mxu0 0.0
        %517 = vmatprep.subr.mxu0 0.0
        %518 = vmatpush1.msra.mxu0 0.0
        %519 = vmatprep.subr.mxu0 0.0
        %520 = vmatpush1.msra.mxu0 0.0
        %521 = vmatprep.subr.mxu0 0.0
        %522 = vmatpush1.msra.mxu0 0.0
        %523 = vmatprep.subr.mxu0 0.0
        %524 = vmatpush1.msra.mxu0 0.0
        %525 = vmatprep.subr.mxu0 0.0
        %526 = vmatpush1.msra.mxu0 0.0
        %527 = vmatprep.mubr.f32.mxu0 0.0
        %528 = vmatmul.mubr.f32.gmra.mrb[0].mxu0 %v439
        %v529 = vpop.f32.mrb[0].mxu0
        %v530 = vadd.f32 %v461, %v529
        %v531 = vpop.f32.mrb[0].mxu0
        %532 = vdwg.mxu0
        %533 = vst [vmem:[%s322] sm:$0xff] %v530
        %p534 = scmp.lt.s32.totalorder %s22, 1
        %s535 = scalar_select %p534, %s22, 1
        %s536 = smul.addr %s535, 8
        %s537 = scalar_lea.vmem %s7, %s536
        // Predicated region
        $region61: #{position_wise_ffn.1} parent=47 // pred_check
          %p538 = pneg %p192
        $region62: #{position_wise_ffn.1} parent=47 // pred_check_branch
          %540 = sbr.rel (%p538) target = $region64
        $region63: #{position_wise_ffn.1} parent=47 // pred_region
          _
        $region64: #{position_wise_ffn.1} parent=47 // pred_fallthru
          _
      $region48: #{position_wise_ffn.1} parent=5 // pred_fallthru
        _
      %p541 = scmp.le.s32.totalorder 2, %s17
      // Predicated region
      $region65: #{position_wise_ffn.1} parent=5 // pred_check
        %p542 = pneg %p541
      $region66: #{position_wise_ffn.1} parent=5 // pred_check_branch
        %544 = sbr.rel (%p542) target = $region68
      $region67: #{position_wise_ffn.1} parent=5 // pred_region
        %s545 = ssub.s32 %s17, 2
        // Predicated region
        $region69: #{position_wise_ffn.1} parent=67 // pred_check
          %p546 = pneg %p198
        $region70: #{position_wise_ffn.1} parent=67 // pred_check_branch
          %548 = sbr.rel (%p546) target = $region72
        $region71: #{position_wise_ffn.1} parent=67 // pred_region
          %p549 = scmp.lt.s32.totalorder %s23, 1
          %s550 = scalar_select %p549, %s23, 1
          %s551 = smul.addr %s550, 8
          %s552 = scalar_lea.vmem %s7, %s551
        $region72: #{position_wise_ffn.1} parent=67 // pred_fallthru
          _
      $region68: #{position_wise_ffn.1} parent=5 // pred_fallthru
        _
    $region6: #{position_wise_ffn.1} parent=1 // loop_footer
      %s21 = sadd.s32 1, %s17
    $region7: #{position_wise_ffn.1} parent=1 // loop_footer_branch
      %16 = sbr.rel target = $region3
    $region8: #{position_wise_ffn.1} parent=1 // loop_exit
      _
    %553 = vsyncpa [#allocation3], 1
    %s554 = scalar_lea.sflag [#allocation3], 1
    %555 = vsyncpa %s554, 1
    %556 = vsyncpa [#allocation5], 1

</llo_original>
